<compile_context>
chip_gen: v7x
topology: tpu7x:2x2x1
jax: 0.10.0
libtpu: 0.0.40
codegen_flags: <defaults>
</compile_context>

<pallas_src>
import functools

import jax
import jax.numpy as jnp
import numpy as np
from jax.experimental import pallas as pl
from jax.experimental.pallas import tpu as pltpu

LANE = 128  # vreg lane width; feature dims are padded to multiples of this


# ----------------------------- fused Pallas kernel --------------------------

def _fused_transformer_kernel(src_ref, tgt_ref, w_cat_ref, w_fc_ref, b_cat_ref,
                              o_ref, *, batch, s_src, s_tgt, dp):
    """Single invocation; the whole forward is resident in VMEM.

    enc = relu(src_flat @ w_enc + b_enc)           [B*S_src, Dp]
    mem = segmented_sum(enc, S_src)                 [B, Dp]   (mean scale folded
                                                               into w_dec2)
    mp  = mem @ w_dec2                              [B, Dp]
    dec = relu(tgt_flat @ w_dec1 + mp[b] + b_dec)   [B*S_tgt, Dp]
    out = sigmoid(dec @ w_fc + b_fc)                [B*S_tgt, Np]
    """
    src = src_ref[...]                              # [B*S_src, Dp]
    tgt = tgt_ref[...]                              # [B*S_tgt, Dp]

    # Static, 128-lane-aligned slices of the packed constants (views, no copy).
    w_enc = w_cat_ref[:, 0:dp]
    w_dec1 = w_cat_ref[:, dp:2 * dp]
    w_dec2 = w_cat_ref[:, 2 * dp:3 * dp]            # pre-scaled by 1/S_src
    b_enc = b_cat_ref[:, 0:dp]
    b_dec = b_cat_ref[:, dp:2 * dp]
    b_fc = b_cat_ref[:, 2 * dp:]

    # Encoder stand-in (all B*S_src rows in one MXU pass).
    enc = jnp.dot(src, w_enc, preferred_element_type=jnp.float32)
    enc = jnp.maximum(enc + b_enc, 0.0)

    # Per-batch mean pool over source positions: segmented sum (XLU sublane
    # reduce; S_src == 8 keeps the reshape tile-aligned), scale folded into
    # w_dec2, then a single [B, Dp] projection.
    mem = jnp.sum(enc.reshape(batch, s_src, dp), axis=1)                # [B, Dp]
    mp = jnp.dot(mem, w_dec2, preferred_element_type=jnp.float32)       # [B, Dp]
    mp_rows = jnp.broadcast_to(mp[:, None, :], (batch, s_tgt, dp))
    mp_rows = mp_rows.reshape(batch * s_tgt, dp)                        # [B*S_tgt, Dp]

    # Decoder stand-in.
    dec = jnp.dot(tgt, w_dec1, preferred_element_type=jnp.float32)
    dec = jnp.maximum(dec + mp_rows + b_dec, 0.0)

    # FC head (the module's own compute): Linear + Sigmoid.
    out = jnp.dot(dec, w_fc_ref[...], preferred_element_type=jnp.float32)
    out = jax.nn.sigmoid(out + b_fc)
    # NOTE: padded output lanes hold sigmoid(0)=0.5; the wrapper slices them off.
    o_ref[...] = out.astype(o_ref.dtype)


# ----------------------------- wrappers --------------------------------------

def _round_up(n, m):
    return ((n + m - 1) // m) * m


def _pad_last(x, n):
    pad = n - x.shape[-1]
    if pad == 0:
        return x
    widths = [(0, 0)] * (x.ndim - 1) + [(0, pad)]
    return jnp.pad(x, widths)


def prepare_params(params, s_src):
    """One-time: zero-pad to lane-dense shapes, fold 1/S_src into w_dec2, and
    pack the constants into two arrays (few large DMAs instead of seven tiny
    ones)."""
    d = params["w_enc"].shape[0]
    n = params["w_fc"].shape[1]
    dp = _round_up(d, LANE)
    np_ = _round_up(n, LANE)

    def pad2(w, rows, cols):
        return jnp.pad(w, ((0, rows - w.shape[0]), (0, cols - w.shape[1])))

    w_enc = pad2(params["w_enc"], dp, dp)
    w_dec1 = pad2(params["w_dec1"], dp, dp)
    w_dec2 = pad2(params["w_dec2"] / float(s_src), dp, dp)   # fold mean's 1/S_src
    b_enc = pad2(params["b_enc"].reshape(1, -1), 1, dp)
    b_dec = pad2(params["b_dec"].reshape(1, -1), 1, dp)
    b_fc = pad2(params["b_fc"].reshape(1, -1), 1, np_)

    return {
        "w_cat": jnp.concatenate([w_enc, w_dec1, w_dec2], axis=1),  # (Dp, 3*Dp)
        "w_fc": pad2(params["w_fc"], dp, np_),                       # (Dp, Np)
        "b_cat": jnp.concatenate([b_enc, b_dec, b_fc], axis=1),      # (1, 2*Dp+Np)
    }


@functools.partial(jax.jit, static_argnames=("out_dim",))
def transformer_v1_forward(pp, src, target, *, out_dim):
    """Mirrors TransformerV1.forward: encode(src) -> decode(target, mem) -> FC+Sigmoid."""
    b, s_src, d = src.shape
    _, s_tgt, _ = target.shape
    dp = pp["w_fc"].shape[0]
    np_ = pp["w_fc"].shape[1]

    # Pad the feature dim only if it is not already lane-aligned (static check,
    # so no pad op is emitted when d == dp).
    if d != dp:
        src = _pad_last(src, dp)
        target = _pad_last(target, dp)

    # Fold batch into the matmul row dimension (free XLA reshape): the single
    # kernel invocation then feeds the MXU B*S rows per pass.
    src_flat = src.reshape(b * s_src, dp)
    tgt_flat = target.reshape(b * s_tgt, dp)

    kernel = functools.partial(
        _fused_transformer_kernel, batch=b, s_src=s_src, s_tgt=s_tgt, dp=dp)

    out_flat = pl.pallas_call(
        kernel,
        out_shape=jax.ShapeDtypeStruct((b * s_tgt, np_), src.dtype),
        # No grid: one invocation, all operands fully resident in VMEM and
        # single-buffered (grid-invariant weights are not double-buffered).
        in_specs=[
            pl.BlockSpec(memory_space=pltpu.MemorySpace.VMEM),   # src_flat
            pl.BlockSpec(memory_space=pltpu.MemorySpace.VMEM),   # tgt_flat
            pl.BlockSpec(memory_space=pltpu.MemorySpace.VMEM),   # w_cat
            pl.BlockSpec(memory_space=pltpu.MemorySpace.VMEM),   # w_fc
            pl.BlockSpec(memory_space=pltpu.MemorySpace.VMEM),   # b_cat
        ],
        out_specs=pl.BlockSpec(memory_space=pltpu.MemorySpace.VMEM),
    )(src_flat, tgt_flat, pp["w_cat"], pp["w_fc"], pp["b_cat"])

    return out_flat.reshape(b, s_tgt, np_)[:, :, :out_dim]


def reference_forward(params, src, target):
    b, _, d = src.shape
    _, s_tgt, _ = target.shape
    enc = jnp.maximum(src @ params["w_enc"] + params["b_enc"], 0.0)
    mem = jnp.broadcast_to(jnp.mean(enc, axis=1)[:, None, :], (b, s_tgt, d))
    dec = jnp.maximum(
        target @ params["w_dec1"] + mem @ params["w_dec2"] + params["b_dec"], 0.0)
    return jax.nn.sigmoid(dec @ params["w_fc"] + params["b_fc"])


# ----------------------------- main ------------------------------------------

if __name__ == "__main__":
    B, S_SRC, S_TGT, DMODEL, OUTDIM = 2, 8, 8, 32, 8

    key = jax.random.PRNGKey(0)
    ks = jax.random.split(key, 10)
    scale = 1.0 / np.sqrt(DMODEL)
    params = {
        "w_enc": jax.random.normal(ks[0], (DMODEL, DMODEL), jnp.float32) * scale,
        "b_enc": jax.random.normal(ks[1], (DMODEL,), jnp.float32) * 0.01,
        "w_dec1": jax.random.normal(ks[2], (DMODEL, DMODEL), jnp.float32) * scale,
        "w_dec2": jax.random.normal(ks[3], (DMODEL, DMODEL), jnp.float32) * scale,
        "b_dec": jax.random.normal(ks[4], (DMODEL,), jnp.float32) * 0.01,
        "w_fc": jax.random.normal(ks[5], (DMODEL, OUTDIM), jnp.float32) * scale,
        "b_fc": jax.random.normal(ks[6], (OUTDIM,), jnp.float32) * 0.01,
    }

    src = jax.random.normal(ks[7], (B, S_SRC, DMODEL), jnp.float32)
    target = jax.random.normal(ks[8], (B, S_TGT, DMODEL), jnp.float32)

    padded_params = prepare_params(params, S_SRC)   # one-time, lane-dense packed

    out = transformer_v1_forward(padded_params, src, target, out_dim=OUTDIM)
    out = jax.block_until_ready(out)

    ref = reference_forward(params, src, target)
    np.testing.assert_allclose(np.asarray(out), np.asarray(ref), rtol=1e-5, atol=1e-5)
    assert out.shape == (B, S_TGT, OUTDIM)

    print("KERNEL_OK")
</pallas_src>

<mosaic_0001>
module attributes {stable_mosaic.version = 11 : i64} {
  func.func @_fused_transformer_kernel(%arg0: memref<16x128xf32, #tpu.memory_space<vmem>>, %arg1: memref<16x128xf32, #tpu.memory_space<vmem>>, %arg2: memref<128x384xf32, #tpu.memory_space<vmem>>, %arg3: memref<128x128xf32, #tpu.memory_space<vmem>>, %arg4: memref<1x384xf32, #tpu.memory_space<vmem>>, %arg5: memref<16x128xf32, #tpu.memory_space<vmem>>) attributes {dimension_semantics = [], scalar_prefetch = 0 : i64, scratch_operands = 0 : i64, tpu.core_type = #tpu.core_type<tc>} {
    %c0 = arith.constant 0 : index
    %c0_0 = arith.constant 0 : index
    %0 = vector.load %arg0[%c0, %c0_0] : memref<16x128xf32, #tpu.memory_space<vmem>>, vector<16x128xf32>
    %c0_1 = arith.constant 0 : index
    %c0_2 = arith.constant 0 : index
    %1 = vector.load %arg1[%c0_1, %c0_2] : memref<16x128xf32, #tpu.memory_space<vmem>>, vector<16x128xf32>
    %c0_3 = arith.constant 0 : index
    %c0_4 = arith.constant 0 : index
    %2 = vector.load %arg2[%c0_3, %c0_4] : memref<128x384xf32, #tpu.memory_space<vmem>>, vector<128x128xf32>
    %c0_5 = arith.constant 0 : index
    %c128 = arith.constant 128 : index
    %3 = vector.load %arg2[%c0_5, %c128] : memref<128x384xf32, #tpu.memory_space<vmem>>, vector<128x128xf32>
    %c0_6 = arith.constant 0 : index
    %c256 = arith.constant 256 : index
    %4 = vector.load %arg2[%c0_6, %c256] : memref<128x384xf32, #tpu.memory_space<vmem>>, vector<128x128xf32>
    %c0_7 = arith.constant 0 : index
    %c0_8 = arith.constant 0 : index
    %5 = vector.load %arg4[%c0_7, %c0_8] : memref<1x384xf32, #tpu.memory_space<vmem>>, vector<1x128xf32>
    %c0_9 = arith.constant 0 : index
    %c128_10 = arith.constant 128 : index
    %6 = vector.load %arg4[%c0_9, %c128_10] : memref<1x384xf32, #tpu.memory_space<vmem>>, vector<1x128xf32>
    %c0_11 = arith.constant 0 : index
    %c256_12 = arith.constant 256 : index
    %7 = vector.load %arg4[%c0_11, %c256_12] : memref<1x384xf32, #tpu.memory_space<vmem>>, vector<1x128xf32>
    %cst = arith.constant dense<0.000000e+00> : vector<16x128xf32>
    %8 = tpu.matmul %0, %2, %cst {dimension_numbers = #tpu.dot_dimension_numbers<[1], [0], [0], [1], [0, 0, 1, 1], [], []>} : vector<16x128xf32>, vector<128x128xf32>, vector<16x128xf32> -> vector<16x128xf32>
    %9 = vector.broadcast %5 : vector<1x128xf32> to vector<16x128xf32>
    %10 = arith.addf %8, %9 : vector<16x128xf32>
    %cst_13 = arith.constant 0.000000e+00 : f32
    %11 = vector.broadcast %cst_13 : f32 to vector<16x128xf32>
    %12 = arith.maximumf %10, %11 : vector<16x128xf32>
    %13 = vector.shape_cast %12 : vector<16x128xf32> to vector<2x8x128xf32>
    %cst_14 = arith.constant dense<0.000000e+00> : vector<2x128xf32>
    %14 = vector.multi_reduction <add>, %13, %cst_14 [1] : vector<2x8x128xf32> to vector<2x128xf32>
    %cst_15 = arith.constant dense<0.000000e+00> : vector<2x128xf32>
    %15 = tpu.matmul %14, %4, %cst_15 {dimension_numbers = #tpu.dot_dimension_numbers<[1], [0], [0], [1], [0, 0, 1, 1], [], []>} : vector<2x128xf32>, vector<128x128xf32>, vector<2x128xf32> -> vector<2x128xf32>
    %16 = vector.shape_cast %15 : vector<2x128xf32> to vector<2x1x128xf32>
    %17 = vector.shape_cast %16 : vector<2x1x128xf32> to vector<2x1x128xf32>
    %18 = vector.broadcast %17 : vector<2x1x128xf32> to vector<2x8x128xf32>
    %19 = vector.shape_cast %18 : vector<2x8x128xf32> to vector<16x128xf32>
    %cst_16 = arith.constant dense<0.000000e+00> : vector<16x128xf32>
    %20 = tpu.matmul %1, %3, %cst_16 {dimension_numbers = #tpu.dot_dimension_numbers<[1], [0], [0], [1], [0, 0, 1, 1], [], []>} : vector<16x128xf32>, vector<128x128xf32>, vector<16x128xf32> -> vector<16x128xf32>
    %21 = arith.addf %20, %19 : vector<16x128xf32>
    %22 = vector.broadcast %6 : vector<1x128xf32> to vector<16x128xf32>
    %23 = arith.addf %21, %22 : vector<16x128xf32>
    %cst_17 = arith.constant 0.000000e+00 : f32
    %24 = vector.broadcast %cst_17 : f32 to vector<16x128xf32>
    %25 = arith.maximumf %23, %24 : vector<16x128xf32>
    %c0_18 = arith.constant 0 : index
    %c0_19 = arith.constant 0 : index
    %26 = vector.load %arg3[%c0_18, %c0_19] : memref<128x128xf32, #tpu.memory_space<vmem>>, vector<128x128xf32>
    %cst_20 = arith.constant dense<0.000000e+00> : vector<16x128xf32>
    %27 = tpu.matmul %25, %26, %cst_20 {dimension_numbers = #tpu.dot_dimension_numbers<[1], [0], [0], [1], [0, 0, 1, 1], [], []>} : vector<16x128xf32>, vector<128x128xf32>, vector<16x128xf32> -> vector<16x128xf32>
    %28 = vector.broadcast %7 : vector<1x128xf32> to vector<16x128xf32>
    %29 = arith.addf %27, %28 : vector<16x128xf32>
    %30 = arith.negf %29 : vector<16x128xf32>
    %31 = math.exp %30 : vector<16x128xf32>
    %cst_21 = arith.constant 1.000000e+00 : f32
    %32 = vector.broadcast %cst_21 : f32 to vector<16x128xf32>
    %33 = arith.addf %32, %31 : vector<16x128xf32>
    %34 = arith.divf %32, %33 : vector<16x128xf32>
    %c0_22 = arith.constant 0 : index
    %c0_23 = arith.constant 0 : index
    %35 = vector.load %arg5[%c0_22, %c0_23] : memref<16x128xf32, #tpu.memory_space<vmem>>, vector<16x128xf32>
    tpu.vector_store %arg5[%c0_22, %c0_23], %34 {strides = array<i32>} : memref<16x128xf32, #tpu.memory_space<vmem>>, vector<16x128xf32>,
    return
  }
}

</mosaic_0001>

<llo_original>
// kernel: transformer_v1_forward.1
$region0: #{transformer_v1_forward.1}
  #allocation0 [shape = 'u32[]', space=smem, size = 0x4, offset = 0x4, fixed_abs, tag = 'smem constant byte address 0x4 - core index']
  #allocation1 [shape = 'u32[144,128]{1,0:T(1,128)}', space=vmem, size = 0x12000, scoped, tag = 'internal scratch']
  %s0 = inlined_call_operand.vmem [shape: f32[16,128], index: 0, kind: input, shape index: {}]
  %s1 = inlined_call_operand.vmem [shape: f32[16,128], index: 1, kind: input, shape index: {}]
  %s2 = inlined_call_operand.hbm [shape: f32[128,384], index: 2, kind: input, shape index: {}]
  %s3 = inlined_call_operand.hbm [shape: f32[128,128], index: 3, kind: input, shape index: {}]
  %s4 = inlined_call_operand.vmem [shape: f32[1,384], index: 4, kind: input, shape index: {}]
  %s5 = inlined_call_operand.hbm [shape: f32[16,128], index: 5, kind: output, shape index: {}]
  %s6 = sld [smem:[#allocation0]]
  $region38: #{transformer_v1_forward.1} parent=0
    _
  %s8 = ssub.s32 1, %s6
  %s9 = scalar_select 0, %s8, %s6
  $region1: #{transformer_v1_forward.1} parent=0
    #allocation2 [shape = 'u8[196608]{0}', space=vmem, size = 0x30000, scoped, tag = 'input window, operand 2, single buffered']
    #allocation3 [shape = 's32[1]{0}', space=sflag, size = 0x4, scoped, tag = 'scoped memory for transformer_v1_forward.1']
    #allocation4 [shape = 's32[1]{0}', space=sflag, size = 0x4, scoped, tag = 'scoped memory for transformer_v1_forward.1']
    #allocation5 [shape = 'u8[65536]{0}', space=vmem, size = 0x10000, scoped, tag = 'input window, operand 3, single buffered']
    #allocation6 [shape = 's32[1]{0}', space=sflag, size = 0x4, scoped, tag = 'scoped memory for transformer_v1_forward.1']
    #allocation7 [shape = 'u8[8192]{0}', space=vmem, size = 0x2000, scoped, tag = 'output window, operand 0, single buffered']
    %10 = vsyncpa [#allocation3], 0
    %11 = vsyncpa [#allocation6], 0
    %12 = vsyncpa [#allocation4], 0
    // Predicated region
    $region2: #{transformer_v1_forward.1} parent=1 // pred_check
      _
    $region3: #{transformer_v1_forward.1} parent=1 // pred_check_branch
      %14 = sbr.rel (0) target = $region5
    $region4: #{transformer_v1_forward.1} parent=1 // pred_region
      _
    $region5: #{transformer_v1_forward.1} parent=1 // pred_fallthru
      _
    // Predicated region
    $region6: #{transformer_v1_forward.1} parent=1 // pred_check
      _
    $region7: #{transformer_v1_forward.1} parent=1 // pred_check_branch
      %16 = sbr.rel (0) target = $region9
    $region8: #{transformer_v1_forward.1} parent=1 // pred_region
      _
    $region9: #{transformer_v1_forward.1} parent=1 // pred_fallthru
      _
    // Predicated region
    $region10: #{transformer_v1_forward.1} parent=1 // pred_check
      _
    $region11: #{transformer_v1_forward.1} parent=1 // pred_check_branch
      %18 = sbr.rel (0) target = $region13
    $region12: #{transformer_v1_forward.1} parent=1 // pred_region
      %s20 = ssub.s32 6144, 6144
      %21 = vsyncadd [#allocation3], %s20
      %s22 = sshll.u32 [#allocation2], 4
      %s23 = int_to_ptr.vmem [resolvable:$true] %s22
      %28 = dma.hbm_to_vmem [thread:$0]  %s2, 6144, %s23, [#allocation3], 384, 384, 24
    $region13: #{transformer_v1_forward.1} parent=1 // pred_fallthru
      _
    // Predicated region
    $region14: #{transformer_v1_forward.1} parent=1 // pred_check
      _
    $region15: #{transformer_v1_forward.1} parent=1 // pred_check_branch
      %30 = sbr.rel (0) target = $region17
    $region16: #{transformer_v1_forward.1} parent=1 // pred_region
      %s32 = ssub.s32 2048, 2048
      %33 = vsyncadd [#allocation6], %s32
      %s34 = sshll.u32 [#allocation5], 4
      %s35 = int_to_ptr.vmem [resolvable:$true] %s34
      %40 = dma.hbm_to_vmem [thread:$0]  %s3, 2048, %s35, [#allocation6], 128, 128, 8
    $region17: #{transformer_v1_forward.1} parent=1 // pred_fallthru
      _
    // Predicated region
    $region18: #{transformer_v1_forward.1} parent=1 // pred_check
      _
    $region19: #{transformer_v1_forward.1} parent=1 // pred_check_branch
      %42 = sbr.rel (0) target = $region21
    $region20: #{transformer_v1_forward.1} parent=1 // pred_region
      _
    $region21: #{transformer_v1_forward.1} parent=1 // pred_fallthru
      _
    // Predicated region
    $region22: #{transformer_v1_forward.1} parent=1 // pred_check
      _
    $region23: #{transformer_v1_forward.1} parent=1 // pred_check_branch
      %44 = sbr.rel (0) target = $region25
    $region24: #{transformer_v1_forward.1} parent=1 // pred_region
      %45 = dma.done [#allocation3], 6144
    $region25: #{transformer_v1_forward.1} parent=1 // pred_fallthru
      _
    // Predicated region
    $region26: #{transformer_v1_forward.1} parent=1 // pred_check
      _
    $region27: #{transformer_v1_forward.1} parent=1 // pred_check_branch
      %47 = sbr.rel (0) target = $region29
    $region28: #{transformer_v1_forward.1} parent=1 // pred_region
      %48 = dma.done [#allocation6], 2048
    $region29: #{transformer_v1_forward.1} parent=1 // pred_fallthru
      _
    %v49 = vld [vmem:[%s0] sm:$0xff]
    %v50 = vld [vmem:[%s0 + $0x8] sm:$0xff]
    %v51 = vld [vmem:[%s1] sm:$0xff]
    %v52 = vld [vmem:[%s1 + $0x8] sm:$0xff]
    %v53 = vld [vmem:[#allocation2] sm:$0xff]
    %v54 = vld [vmem:[#allocation2 + $0x18] sm:$0xff]
    %v55 = vld [vmem:[#allocation2 + $0x30] sm:$0xff]
    %v56 = vld [vmem:[#allocation2 + $0x48] sm:$0xff]
    %v57 = vld [vmem:[#allocation2 + $0x60] sm:$0xff]
    %v58 = vld [vmem:[#allocation2 + $0x78] sm:$0xff]
    %v59 = vld [vmem:[#allocation2 + $0x90] sm:$0xff]
    %v60 = vld [vmem:[#allocation2 + $0xa8] sm:$0xff]
    %v61 = vld [vmem:[#allocation2 + $0xc0] sm:$0xff]
    %v62 = vld [vmem:[#allocation2 + $0xd8] sm:$0xff]
    %v63 = vld [vmem:[#allocation2 + $0xf0] sm:$0xff]
    %v64 = vld [vmem:[#allocation2 + $0x108] sm:$0xff]
    %v65 = vld [vmem:[#allocation2 + $0x120] sm:$0xff]
    %v66 = vld [vmem:[#allocation2 + $0x138] sm:$0xff]
    %v67 = vld [vmem:[#allocation2 + $0x150] sm:$0xff]
    %v68 = vld [vmem:[#allocation2 + $0x168] sm:$0xff]
    %v69 = vld [vmem:[#allocation2 + $0x8] sm:$0xff]
    %v70 = vld [vmem:[#allocation2 + $0x20] sm:$0xff]
    %v71 = vld [vmem:[#allocation2 + $0x38] sm:$0xff]
    %v72 = vld [vmem:[#allocation2 + $0x50] sm:$0xff]
    %v73 = vld [vmem:[#allocation2 + $0x68] sm:$0xff]
    %v74 = vld [vmem:[#allocation2 + $0x80] sm:$0xff]
    %v75 = vld [vmem:[#allocation2 + $0x98] sm:$0xff]
    %v76 = vld [vmem:[#allocation2 + $0xb0] sm:$0xff]
    %v77 = vld [vmem:[#allocation2 + $0xc8] sm:$0xff]
    %v78 = vld [vmem:[#allocation2 + $0xe0] sm:$0xff]
    %v79 = vld [vmem:[#allocation2 + $0xf8] sm:$0xff]
    %v80 = vld [vmem:[#allocation2 + $0x110] sm:$0xff]
    %v81 = vld [vmem:[#allocation2 + $0x128] sm:$0xff]
    %v82 = vld [vmem:[#allocation2 + $0x140] sm:$0xff]
    %v83 = vld [vmem:[#allocation2 + $0x158] sm:$0xff]
    %v84 = vld [vmem:[#allocation2 + $0x170] sm:$0xff]
    %v85 = vld [vmem:[#allocation2 + $0x10] sm:$0xff]
    %v86 = vld [vmem:[#allocation2 + $0x28] sm:$0xff]
    %v87 = vld [vmem:[#allocation2 + $0x40] sm:$0xff]
    %v88 = vld [vmem:[#allocation2 + $0x58] sm:$0xff]
    %v89 = vld [vmem:[#allocation2 + $0x70] sm:$0xff]
    %v90 = vld [vmem:[#allocation2 + $0x88] sm:$0xff]
    %v91 = vld [vmem:[#allocation2 + $0xa0] sm:$0xff]
    %v92 = vld [vmem:[#allocation2 + $0xb8] sm:$0xff]
    %v93 = vld [vmem:[#allocation2 + $0xd0] sm:$0xff]
    %v94 = vld [vmem:[#allocation2 + $0xe8] sm:$0xff]
    %v95 = vld [vmem:[#allocation2 + $0x100] sm:$0xff]
    %v96 = vld [vmem:[#allocation2 + $0x118] sm:$0xff]
    %v97 = vld [vmem:[#allocation2 + $0x130] sm:$0xff]
    %v98 = vld [vmem:[#allocation2 + $0x148] sm:$0xff]
    %v99 = vld [vmem:[#allocation2 + $0x160] sm:$0xff]
    %v100 = vld [vmem:[#allocation2 + $0x178] sm:$0xff]
    %v101 = vld [vmem:[%s4] sm:$0x1]
    %v102 = vld [vmem:[%s4 + $0x1] sm:$0x1]
    %v103 = vld [vmem:[%s4 + $0x2] sm:$0x1]
    %v105 = vlaneseq
    %v106 = vshrl.u32 %v105, 7
    %v107 = vsub.s32 0, %v106
    %v108 = vrot.slane %v101, %v107
    %110 = vmatprep.subr.mxu0 0.0
    %111 = vmatpush1.msra.mxu0 %v53
    %112 = vmatprep.subr.mxu0 0.0
    %113 = vmatpush1.msra.mxu0 %v54
    %114 = vmatprep.subr.mxu0 0.0
    %115 = vmatpush1.msra.mxu0 %v55
    %116 = vmatprep.subr.mxu0 0.0
    %117 = vmatpush1.msra.mxu0 %v56
    %118 = vmatprep.subr.mxu0 0.0
    %119 = vmatpush1.msra.mxu0 %v57
    %120 = vmatprep.subr.mxu0 0.0
    %121 = vmatpush1.msra.mxu0 %v58
    %122 = vmatprep.subr.mxu0 0.0
    %123 = vmatpush1.msra.mxu0 %v59
    %124 = vmatprep.subr.mxu0 0.0
    %125 = vmatpush1.msra.mxu0 %v60
    %126 = vmatprep.subr.mxu0 0.0
    %127 = vmatpush1.msra.mxu0 %v61
    %128 = vmatprep.subr.mxu0 0.0
    %129 = vmatpush1.msra.mxu0 %v62
    %130 = vmatprep.subr.mxu0 0.0
    %131 = vmatpush1.msra.mxu0 %v63
    %132 = vmatprep.subr.mxu0 0.0
    %133 = vmatpush1.msra.mxu0 %v64
    %134 = vmatprep.subr.mxu0 0.0
    %135 = vmatpush1.msra.mxu0 %v65
    %136 = vmatprep.subr.mxu0 0.0
    %137 = vmatpush1.msra.mxu0 %v66
    %138 = vmatprep.subr.mxu0 0.0
    %139 = vmatpush1.msra.mxu0 %v67
    %140 = vmatprep.subr.mxu0 0.0
    %141 = vmatpush1.msra.mxu0 %v68
    %142 = vmatprep.subr.mxu0 0.0
    %143 = vmatpush1.msra.mxu0 0.0
    %144 = vmatprep.subr.mxu0 0.0
    %145 = vmatpush1.msra.mxu0 0.0
    %146 = vmatprep.subr.mxu0 0.0
    %147 = vmatpush1.msra.mxu0 0.0
    %148 = vmatprep.subr.mxu0 0.0
    %149 = vmatpush1.msra.mxu0 0.0
    %150 = vmatprep.subr.mxu0 0.0
    %151 = vmatpush1.msra.mxu0 0.0
    %152 = vmatprep.subr.mxu0 0.0
    %153 = vmatpush1.msra.mxu0 0.0
    %154 = vmatprep.subr.mxu0 0.0
    %155 = vmatpush1.msra.mxu0 0.0
    %156 = vmatprep.subr.mxu0 0.0
    %157 = vmatpush1.msra.mxu0 0.0
    %158 = vmatprep.subr.mxu0 0.0
    %159 = vmatpush1.msra.mxu0 0.0
    %160 = vmatprep.subr.mxu0 0.0
    %161 = vmatpush1.msra.mxu0 0.0
    %162 = vmatprep.subr.mxu0 0.0
    %163 = vmatpush1.msra.mxu0 0.0
    %164 = vmatprep.subr.mxu0 0.0
    %165 = vmatpush1.msra.mxu0 0.0
    %166 = vmatprep.subr.mxu0 0.0
    %167 = vmatpush1.msra.mxu0 0.0
    %168 = vmatprep.subr.mxu0 0.0
    %169 = vmatpush1.msra.mxu0 0.0
    %170 = vmatprep.subr.mxu0 0.0
    %171 = vmatpush1.msra.mxu0 0.0
    %172 = vmatprep.subr.mxu0 0.0
    %173 = vmatpush1.msra.mxu0 0.0
    %174 = vmatprep.mubr.f32.mxu0 0.0
    %175 = vmatmul.mubr.f32.gmra.mrb[0].mxu0 %v49
    %v176 = vpop.f32.mrb[0].mxu0
    %v177 = vadd.f32 %v108, %v176
    %v178 = vpop.f32.mrb[0].mxu0
    %179 = vmatprep.mubr.f32.mxu0 0.0
    %180 = vmatmul.mubr.f32.gmra.mrb[0].mxu0 %v50
    %v181 = vpop.f32.mrb[0].mxu0
    %v182 = vadd.f32 %v108, %v181
    %v183 = vpop.f32.mrb[0].mxu0
    %184 = vdwg.mxu0
    %v185 = vmax.f32 %v177, 0.0
    %v186 = vmax.f32 %v182, 0.0
    %v187 = vrot.slane %v185, 4
    %v188 = vadd.f32 %v185, %v187
    %v189 = vrot.slane %v188, 2
    %v190 = vadd.f32 %v188, %v189
    %v191 = vrot.slane %v190, 1
    %v192 = vadd.f32 %v190, %v191
    %v193 = vrot.slane %v186, 4
    %v194 = vadd.f32 %v186, %v193
    %v195 = vrot.slane %v194, 2
    %v196 = vadd.f32 %v194, %v195
    %v197 = vrot.slane %v196, 1
    %v198 = vadd.f32 %v196, %v197
    %vm201 = vcmask 1041409
    %v202 = vsel %vm201, %v198, %v192
    %204 = vmatprep.subr.mxu0 0.0
    %205 = vmatpush1.msra.mxu0 %v85
    %206 = vmatprep.subr.mxu0 0.0
    %207 = vmatpush1.msra.mxu0 %v86
    %208 = vmatprep.subr.mxu0 0.0
    %209 = vmatpush1.msra.mxu0 %v87
    %210 = vmatprep.subr.mxu0 0.0
    %211 = vmatpush1.msra.mxu0 %v88
    %212 = vmatprep.subr.mxu0 0.0
    %213 = vmatpush1.msra.mxu0 %v89
    %214 = vmatprep.subr.mxu0 0.0
    %215 = vmatpush1.msra.mxu0 %v90
    %216 = vmatprep.subr.mxu0 0.0
    %217 = vmatpush1.msra.mxu0 %v91
    %218 = vmatprep.subr.mxu0 0.0
    %219 = vmatpush1.msra.mxu0 %v92
    %220 = vmatprep.subr.mxu0 0.0
    %221 = vmatpush1.msra.mxu0 %v93
    %222 = vmatprep.subr.mxu0 0.0
    %223 = vmatpush1.msra.mxu0 %v94
    %224 = vmatprep.subr.mxu0 0.0
    %225 = vmatpush1.msra.mxu0 %v95
    %226 = vmatprep.subr.mxu0 0.0
    %227 = vmatpush1.msra.mxu0 %v96
    %228 = vmatprep.subr.mxu0 0.0
    %229 = vmatpush1.msra.mxu0 %v97
    %230 = vmatprep.subr.mxu0 0.0
    %231 = vmatpush1.msra.mxu0 %v98
    %232 = vmatprep.subr.mxu0 0.0
    %233 = vmatpush1.msra.mxu0 %v99
    %234 = vmatprep.subr.mxu0 0.0
    %235 = vmatpush1.msra.mxu0 %v100
    %236 = vmatprep.subr.mxu0 0.0
    %237 = vmatpush1.msra.mxu0 0.0
    %238 = vmatprep.subr.mxu0 0.0
    %239 = vmatpush1.msra.mxu0 0.0
    %240 = vmatprep.subr.mxu0 0.0
    %241 = vmatpush1.msra.mxu0 0.0
    %242 = vmatprep.subr.mxu0 0.0
    %243 = vmatpush1.msra.mxu0 0.0
    %244 = vmatprep.subr.mxu0 0.0
    %245 = vmatpush1.msra.mxu0 0.0
    %246 = vmatprep.subr.mxu0 0.0
    %247 = vmatpush1.msra.mxu0 0.0
    %248 = vmatprep.subr.mxu0 0.0
    %249 = vmatpush1.msra.mxu0 0.0
    %250 = vmatprep.subr.mxu0 0.0
    %251 = vmatpush1.msra.mxu0 0.0
    %252 = vmatprep.subr.mxu0 0.0
    %253 = vmatpush1.msra.mxu0 0.0
    %254 = vmatprep.subr.mxu0 0.0
    %255 = vmatpush1.msra.mxu0 0.0
    %256 = vmatprep.subr.mxu0 0.0
    %257 = vmatpush1.msra.mxu0 0.0
    %258 = vmatprep.subr.mxu0 0.0
    %259 = vmatpush1.msra.mxu0 0.0
    %260 = vmatprep.subr.mxu0 0.0
    %261 = vmatpush1.msra.mxu0 0.0
    %262 = vmatprep.subr.mxu0 0.0
    %263 = vmatpush1.msra.mxu0 0.0
    %264 = vmatprep.subr.mxu0 0.0
    %265 = vmatpush1.msra.mxu0 0.0
    %266 = vmatprep.subr.mxu0 0.0
    %267 = vmatpush1.msra.mxu0 0.0
    %268 = vmatprep.mubr.f32.mxu0 0.0
    %269 = vmatmul.mubr.f32.gmra.mrb[0].mxu0 %v202
    %v270 = vpop.f32.mrb[0].mxu0
    %v271 = vadd.f32 0.0, %v270
    %v272 = vpop.f32.mrb[0].mxu0
    %273 = vdwg.mxu0
    %v276 = vunpack.c.l.s4 1966171168
    %v277 = vunpack.c.0.s8 %v276
    %v278 = vlaneseq
    %v279 = vshrl.u32 %v278, 7
    %v280 = vsub.s32 %v277, %v279
    %v281 = vrot.slane %v271, %v280
    %v282 = vcombine.high %v281, %v281
    %v284 = vunpack.c.l.s4 1966171168
    %v285 = vunpack.c.0.s8 %v284
    %v286 = vlaneseq
    %v287 = vshrl.u32 %v286, 7
    %v288 = vsub.s32 %v285, %v287
    %v289 = vrot.slane %v281, %v288
    %v291 = vunpack.c.l.s4 1966171168
    %v292 = vunpack.c.0.s8 %v291
    %v293 = vlaneseq
    %v294 = vshrl.u32 %v293, 7
    %v295 = vsub.s32 %v292, %v294
    %v296 = vrot.slane %v282, %v295
    %v297 = vlaneseq
    %v298 = vshrl.u32 %v297, 7
    %v299 = vsub.s32 0, %v298
    %v300 = vrot.slane %v289, %v299
    %v301 = vlaneseq
    %v302 = vshrl.u32 %v301, 7
    %v303 = vsub.s32 0, %v302
    %v304 = vrot.slane %v296, %v303
    %307 = vmatprep.subr.mxu0 0.0
    %308 = vmatpush1.msra.mxu0 %v69
    %309 = vmatprep.subr.mxu0 0.0
    %310 = vmatpush1.msra.mxu0 %v70
    %311 = vmatprep.subr.mxu0 0.0
    %312 = vmatpush1.msra.mxu0 %v71
    %313 = vmatprep.subr.mxu0 0.0
    %314 = vmatpush1.msra.mxu0 %v72
    %315 = vmatprep.subr.mxu0 0.0
    %316 = vmatpush1.msra.mxu0 %v73
    %317 = vmatprep.subr.mxu0 0.0
    %318 = vmatpush1.msra.mxu0 %v74
    %319 = vmatprep.subr.mxu0 0.0
    %320 = vmatpush1.msra.mxu0 %v75
    %321 = vmatprep.subr.mxu0 0.0
    %322 = vmatpush1.msra.mxu0 %v76
    %323 = vmatprep.subr.mxu0 0.0
    %324 = vmatpush1.msra.mxu0 %v77
    %325 = vmatprep.subr.mxu0 0.0
    %326 = vmatpush1.msra.mxu0 %v78
    %327 = vmatprep.subr.mxu0 0.0
    %328 = vmatpush1.msra.mxu0 %v79
    %329 = vmatprep.subr.mxu0 0.0
    %330 = vmatpush1.msra.mxu0 %v80
    %331 = vmatprep.subr.mxu0 0.0
    %332 = vmatpush1.msra.mxu0 %v81
    %333 = vmatprep.subr.mxu0 0.0
    %334 = vmatpush1.msra.mxu0 %v82
    %335 = vmatprep.subr.mxu0 0.0
    %336 = vmatpush1.msra.mxu0 %v83
    %337 = vmatprep.subr.mxu0 0.0
    %338 = vmatpush1.msra.mxu0 %v84
    %339 = vmatprep.subr.mxu0 0.0
    %340 = vmatpush1.msra.mxu0 0.0
    %341 = vmatprep.subr.mxu0 0.0
    %342 = vmatpush1.msra.mxu0 0.0
    %343 = vmatprep.subr.mxu0 0.0
    %344 = vmatpush1.msra.mxu0 0.0
    %345 = vmatprep.subr.mxu0 0.0
    %346 = vmatpush1.msra.mxu0 0.0
    %347 = vmatprep.subr.mxu0 0.0
    %348 = vmatpush1.msra.mxu0 0.0
    %349 = vmatprep.subr.mxu0 0.0
    %350 = vmatpush1.msra.mxu0 0.0
    %351 = vmatprep.subr.mxu0 0.0
    %352 = vmatpush1.msra.mxu0 0.0
    %353 = vmatprep.subr.mxu0 0.0
    %354 = vmatpush1.msra.mxu0 0.0
    %355 = vmatprep.subr.mxu0 0.0
    %356 = vmatpush1.msra.mxu0 0.0
    %357 = vmatprep.subr.mxu0 0.0
    %358 = vmatpush1.msra.mxu0 0.0
    %359 = vmatprep.subr.mxu0 0.0
    %360 = vmatpush1.msra.mxu0 0.0
    %361 = vmatprep.subr.mxu0 0.0
    %362 = vmatpush1.msra.mxu0 0.0
    %363 = vmatprep.subr.mxu0 0.0
    %364 = vmatpush1.msra.mxu0 0.0
    %365 = vmatprep.subr.mxu0 0.0
    %366 = vmatpush1.msra.mxu0 0.0
    %367 = vmatprep.subr.mxu0 0.0
    %368 = vmatpush1.msra.mxu0 0.0
    %369 = vmatprep.subr.mxu0 0.0
    %370 = vmatpush1.msra.mxu0 0.0
    %371 = vmatprep.mubr.f32.mxu0 0.0
    %372 = vmatmul.mubr.f32.gmra.mrb[0].mxu0 %v51
    %v373 = vpop.f32.mrb[0].mxu0
    %v374 = vadd.f32 %v300, %v373
    %v375 = vpop.f32.mrb[0].mxu0
    %376 = vmatprep.mubr.f32.mxu0 0.0
    %377 = vmatmul.mubr.f32.gmra.mrb[0].mxu0 %v52
    %v378 = vpop.f32.mrb[0].mxu0
    %v379 = vadd.f32 %v304, %v378
    %v380 = vpop.f32.mrb[0].mxu0
    %381 = vdwg.mxu0
    %v383 = vlaneseq
    %v384 = vshrl.u32 %v383, 7
    %v385 = vsub.s32 0, %v384
    %v386 = vrot.slane %v102, %v385
    %v388 = vadd.f32 %v374, %v386
    %v389 = vadd.f32 %v379, %v386
    %v390 = vmax.f32 %v388, 0.0
    %v391 = vmax.f32 %v389, 0.0
    %v392 = vld [vmem:[#allocation5] sm:$0xff]
    %v393 = vld [vmem:[#allocation5 + $0x8] sm:$0xff]
    %v394 = vld [vmem:[#allocation5 + $0x10] sm:$0xff]
    %v395 = vld [vmem:[#allocation5 + $0x18] sm:$0xff]
    %v396 = vld [vmem:[#allocation5 + $0x20] sm:$0xff]
    %v397 = vld [vmem:[#allocation5 + $0x28] sm:$0xff]
    %v398 = vld [vmem:[#allocation5 + $0x30] sm:$0xff]
    %v399 = vld [vmem:[#allocation5 + $0x38] sm:$0xff]
    %v400 = vld [vmem:[#allocation5 + $0x40] sm:$0xff]
    %v401 = vld [vmem:[#allocation5 + $0x48] sm:$0xff]
    %v402 = vld [vmem:[#allocation5 + $0x50] sm:$0xff]
    %v403 = vld [vmem:[#allocation5 + $0x58] sm:$0xff]
    %v404 = vld [vmem:[#allocation5 + $0x60] sm:$0xff]
    %v405 = vld [vmem:[#allocation5 + $0x68] sm:$0xff]
    %v406 = vld [vmem:[#allocation5 + $0x70] sm:$0xff]
    %v407 = vld [vmem:[#allocation5 + $0x78] sm:$0xff]
    %v409 = vlaneseq
    %v410 = vshrl.u32 %v409, 7
    %v411 = vsub.s32 0, %v410
    %v412 = vrot.slane %v103, %v411
    %414 = vmatprep.subr.mxu0 0.0
    %415 = vmatpush1.msra.mxu0 %v392
    %416 = vmatprep.subr.mxu0 0.0
    %417 = vmatpush1.msra.mxu0 %v393
    %418 = vmatprep.subr.mxu0 0.0
    %419 = vmatpush1.msra.mxu0 %v394
    %420 = vmatprep.subr.mxu0 0.0
    %421 = vmatpush1.msra.mxu0 %v395
    %422 = vmatprep.subr.mxu0 0.0
    %423 = vmatpush1.msra.mxu0 %v396
    %424 = vmatprep.subr.mxu0 0.0
    %425 = vmatpush1.msra.mxu0 %v397
    %426 = vmatprep.subr.mxu0 0.0
    %427 = vmatpush1.msra.mxu0 %v398
    %428 = vmatprep.subr.mxu0 0.0
    %429 = vmatpush1.msra.mxu0 %v399
    %430 = vmatprep.subr.mxu0 0.0
    %431 = vmatpush1.msra.mxu0 %v400
    %432 = vmatprep.subr.mxu0 0.0
    %433 = vmatpush1.msra.mxu0 %v401
    %434 = vmatprep.subr.mxu0 0.0
    %435 = vmatpush1.msra.mxu0 %v402
    %436 = vmatprep.subr.mxu0 0.0
    %437 = vmatpush1.msra.mxu0 %v403
    %438 = vmatprep.subr.mxu0 0.0
    %439 = vmatpush1.msra.mxu0 %v404
    %440 = vmatprep.subr.mxu0 0.0
    %441 = vmatpush1.msra.mxu0 %v405
    %442 = vmatprep.subr.mxu0 0.0
    %443 = vmatpush1.msra.mxu0 %v406
    %444 = vmatprep.subr.mxu0 0.0
    %445 = vmatpush1.msra.mxu0 %v407
    %446 = vmatprep.subr.mxu0 0.0
    %447 = vmatpush1.msra.mxu0 0.0
    %448 = vmatprep.subr.mxu0 0.0
    %449 = vmatpush1.msra.mxu0 0.0
    %450 = vmatprep.subr.mxu0 0.0
    %451 = vmatpush1.msra.mxu0 0.0
    %452 = vmatprep.subr.mxu0 0.0
    %453 = vmatpush1.msra.mxu0 0.0
    %454 = vmatprep.subr.mxu0 0.0
    %455 = vmatpush1.msra.mxu0 0.0
    %456 = vmatprep.subr.mxu0 0.0
    %457 = vmatpush1.msra.mxu0 0.0
    %458 = vmatprep.subr.mxu0 0.0
    %459 = vmatpush1.msra.mxu0 0.0
    %460 = vmatprep.subr.mxu0 0.0
    %461 = vmatpush1.msra.mxu0 0.0
    %462 = vmatprep.subr.mxu0 0.0
    %463 = vmatpush1.msra.mxu0 0.0
    %464 = vmatprep.subr.mxu0 0.0
    %465 = vmatpush1.msra.mxu0 0.0
    %466 = vmatprep.subr.mxu0 0.0
    %467 = vmatpush1.msra.mxu0 0.0
    %468 = vmatprep.subr.mxu0 0.0
    %469 = vmatpush1.msra.mxu0 0.0
    %470 = vmatprep.subr.mxu0 0.0
    %471 = vmatpush1.msra.mxu0 0.0
    %472 = vmatprep.subr.mxu0 0.0
    %473 = vmatpush1.msra.mxu0 0.0
    %474 = vmatprep.subr.mxu0 0.0
    %475 = vmatpush1.msra.mxu0 0.0
    %476 = vmatprep.subr.mxu0 0.0
    %477 = vmatpush1.msra.mxu0 0.0
    %478 = vmatprep.mubr.f32.mxu0 0.0
    %479 = vmatmul.mubr.f32.gmra.mrb[0].mxu0 %v390
    %v480 = vpop.f32.mrb[0].mxu0
    %v481 = vadd.f32 %v412, %v480
    %v482 = vpop.f32.mrb[0].mxu0
    %483 = vmatprep.mubr.f32.mxu0 0.0
    %484 = vmatmul.mubr.f32.gmra.mrb[0].mxu0 %v391
    %v485 = vpop.f32.mrb[0].mxu0
    %v486 = vadd.f32 %v412, %v485
    %v487 = vpop.f32.mrb[0].mxu0
    %488 = vdwg.mxu0
    %v489 = vxor.u32 %v481, 2147483648
    %v490 = vxor.u32 %v486, 2147483648
    %v491 = vmul.f32 %v489, 1.442695
    %v492 = vpow.pop %v491
    %v493 = vmul.f32 %v490, 1.442695
    %v494 = vpow.pop %v493
    %v495 = vadd.f32 %v492, 1.0
    %v496 = vadd.f32 %v494, 1.0
    %v497 = vrcp.pop %v495
    %v498 = vmul.f32 1.0, %v497
    %v499 = vrcp.pop %v496
    %v500 = vmul.f32 1.0, %v499
    %501 = vst [vmem:[#allocation7] sm:$0xff] %v498
    %502 = vst [vmem:[#allocation7 + $0x8] sm:$0xff] %v500
    // Predicated region
    $region30: #{transformer_v1_forward.1} parent=1 // pred_check
      _
    $region31: #{transformer_v1_forward.1} parent=1 // pred_check_branch
      %504 = sbr.rel (0) target = $region33
    $region32: #{transformer_v1_forward.1} parent=1 // pred_region
      %s506 = ssub.s32 256, 256
      %507 = vsyncadd [#allocation4], %s506
      %s508 = sshll.u32 [#allocation7], 4
      %s509 = int_to_ptr.vmem [resolvable:$true] %s508
      %514 = dma.vmem_to_hbm [thread:$0]  %s509, 256, %s5, [#allocation4], 128, 128, 8
    $region33: #{transformer_v1_forward.1} parent=1 // pred_fallthru
      _
    // Predicated region
    $region34: #{transformer_v1_forward.1} parent=1 // pred_check
      _
    $region35: #{transformer_v1_forward.1} parent=1 // pred_check_branch
      %516 = sbr.rel (0) target = $region37
    $region36: #{transformer_v1_forward.1} parent=1 // pred_region
      %517 = dma.done [#allocation4], 256
    $region37: #{transformer_v1_forward.1} parent=1 // pred_fallthru
      _
    %518 = vsyncpa [#allocation3], 1
    %519 = vsyncpa [#allocation6], 1
    %520 = vsyncpa [#allocation4], 1

</llo_original>
